<compile_context>
chip_gen: v6e
topology: v6e:2x2x1
jax: 0.10.0
libtpu: 0.0.40
codegen_flags: <defaults>
</compile_context>

<pallas_src>
import functools

import numpy as np
import jax
import jax.numpy as jnp
from jax.experimental import pallas as pl
from jax.experimental.pallas import tpu as pltpu


def _round_up(x, m):
    return (x + m - 1) // m * m


# ----------------------------------------------------------------------------
# Fused kernel: per row-tile, per-source weights picked via scalar prefetch.
# ----------------------------------------------------------------------------
def _fused_embed_kernel(sid_ref, x_ref, w1_ref, b1_ref, w2_ref, b2_ref, m_ref, o_ref):
    # sid: [n_tiles] int32 (SMEM, used only by index_maps)
    # x  : [TM, K]     padded features, source_time folded in as last column
    # w1 : [1, K, H]   per-source first-layer weight (w_time row folded in)
    # b1 : [1, 1, H]   per-source first-layer bias
    # w2 : [H, H]      shared second-layer weight  (= final_w[P:, :])
    # b2 : [1, 1, H]   per-source second-layer bias (= pos_i @ final_w[:P,:] + final_b)
    # m  : [TM, 1]     sequence mask (0 for masked / padded rows)
    del sid_ref
    h = jnp.dot(x_ref[...], w1_ref[0], preferred_element_type=jnp.float32)
    h = jax.nn.gelu(h + b1_ref[0], approximate=True)
    y = jnp.dot(h, w2_ref[...], preferred_element_type=jnp.float32)
    y = jax.nn.gelu(y + b2_ref[0], approximate=True)
    o_ref[...] = (y * m_ref[...]).astype(o_ref.dtype)


# ----------------------------------------------------------------------------
# Module-level forward
# ----------------------------------------------------------------------------
def multi_input_vector_embedding(params, sources, source_time, input_is_sequential,
                                 row_tile=128):
    """
    sources: list of (data [B, T_i, D_i] float32, mask [B, T_i] bool)
    source_time: [B] float32
    Returns (embeddings [T, B, H], padding_mask [B, T], sequence_mask [T, B, 1],
             global_mask [T])
    """
    hidden = params["final_w"].shape[1]
    pos_dim = params["final_w"].shape[0] - hidden
    n_src = len(sources)
    d_max = max(int(d.shape[-1]) for d, _ in sources)
    k_pad = _round_up(d_max + 1, 8)   # features + folded time column, sublane-padded

    x_blocks, m_blocks, src_ids = [], [], []
    row_counts, pad_counts = [], []
    padding_masks, sequence_masks, global_masks = [], [], []

    for i, (data, mask) in enumerate(sources):
        B, T_i, D_i = data.shape
        n_rows = T_i * B
        n_pad = _round_up(n_rows, row_tile)

        # Time-major rows [T_i*B, ...] so kernel output is already in the final
        # concatenated [T, B, H] order.
        x_tm = jnp.transpose(data, (1, 0, 2)).reshape(n_rows, D_i).astype(jnp.float32)
        t_tm = jnp.broadcast_to(source_time[None, :], (T_i, B)).reshape(n_rows)
        x_full = jnp.zeros((n_pad, k_pad), jnp.float32)
        x_full = x_full.at[:n_rows, :D_i].set(x_tm)
        x_full = x_full.at[:n_rows, k_pad - 1].set(t_tm.astype(jnp.float32))

        m_tm = jnp.transpose(mask, (1, 0)).reshape(n_rows, 1).astype(jnp.float32)
        m_full = jnp.zeros((n_pad, 1), jnp.float32).at[:n_rows].set(m_tm)

        x_blocks.append(x_full)
        m_blocks.append(m_full)
        src_ids.extend([i] * (n_pad // row_tile))
        row_counts.append(n_rows)
        pad_counts.append(n_pad)

        padding_masks.append(~mask)
        sequence_masks.append(jnp.transpose(mask, (1, 0))[:, :, None])
        global_masks.append(jnp.full((T_i,), bool(input_is_sequential[i]), jnp.bool_))

    x_all = jnp.concatenate(x_blocks, axis=0)
    m_all = jnp.concatenate(m_blocks, axis=0)
    sid = jnp.asarray(np.array(src_ids, dtype=np.int32))

    # Stacked per-source weights: time term folded into w1; position embedding
    # folded into the second-stage bias (exact: concat(pos,h)@Wf = pos@Wf[:P] + h@Wf[P:]).
    w1 = jnp.zeros((n_src, k_pad, hidden), jnp.float32)
    b1 = jnp.zeros((n_src, 1, hidden), jnp.float32)
    b2 = jnp.zeros((n_src, 1, hidden), jnp.float32)
    for i, (data, _) in enumerate(sources):
        D_i = data.shape[-1]
        w1 = w1.at[i, :D_i, :].set(params["vec_w"][i])
        w1 = w1.at[i, k_pad - 1, :].set(params["vec_wt"][i][0])
        b1 = b1.at[i, 0, :].set(params["vec_b"][i][0])
        b2 = b2.at[i, 0, :].set(
            params["pos"][i] @ params["final_w"][:pos_dim, :] + params["final_b"][0])
    w2 = params["final_w"][pos_dim:, :]

    n_total = x_all.shape[0]
    n_tiles = n_total // row_tile

    out = pl.pallas_call(
        _fused_embed_kernel,
        out_shape=jax.ShapeDtypeStruct((n_total, hidden), jnp.float32),
        grid_spec=pltpu.PrefetchScalarGridSpec(
            num_scalar_prefetch=1,
            grid=(n_tiles,),
            in_specs=[
                pl.BlockSpec((row_tile, k_pad), lambda i, sid: (i, 0)),
                pl.BlockSpec((1, k_pad, hidden), lambda i, sid: (sid[i], 0, 0)),
                pl.BlockSpec((1, 1, hidden), lambda i, sid: (sid[i], 0, 0)),
                pl.BlockSpec((hidden, hidden), lambda i, sid: (0, 0)),
                pl.BlockSpec((1, 1, hidden), lambda i, sid: (sid[i], 0, 0)),
                pl.BlockSpec((row_tile, 1), lambda i, sid: (i, 0)),
            ],
            out_specs=pl.BlockSpec((row_tile, hidden), lambda i, sid: (i, 0)),
        ),
        compiler_params=pltpu.CompilerParams(
            dimension_semantics=("parallel",)),  # shard row tiles over v7x's 2 TCs
    )(sid, x_all, w1, b1, w2, b2, m_all)

    # Strip per-source row padding and reassemble the time-major [T, B, H] output.
    pieces, off = [], 0
    for n_rows, n_pad in zip(row_counts, pad_counts):
        pieces.append(out[off:off + n_rows])
        off += n_pad
    B = sources[0][0].shape[0]
    emb = jnp.concatenate(pieces, axis=0).reshape(-1, B, hidden)   # [T, B, H]

    padding_mask = jnp.concatenate(padding_masks, axis=1)     # [B, T]
    sequence_mask = jnp.concatenate(sequence_masks, axis=0)   # [T, B, 1]
    global_mask = jnp.concatenate(global_masks, axis=0)       # [T]
    return emb, padding_mask, sequence_mask, global_mask


# ----------------------------------------------------------------------------
# Pure-JAX reference (unfused, matches the original module structure)
# ----------------------------------------------------------------------------
def _reference_forward(params, sources, source_time, input_is_sequential):
    hidden = params["final_w"].shape[1]
    pos_dim = params["final_w"].shape[0] - hidden
    embs, pads, seqs, globs = [], [], [], []
    for i, (data, mask) in enumerate(sources):
        B, T_i, D_i = data.shape
        t = source_time[:, None]                                   # [B, 1]
        h = jnp.einsum("btd,dh->bth", data, params["vec_w"][i])
        h = h + params["vec_b"][i][None] + t[:, :, None] * params["vec_wt"][i][None]
        h = jax.nn.gelu(h, approximate=True) * mask[:, :, None]
        h = jnp.transpose(h, (1, 0, 2))                            # [T_i, B, H]
        pos = jnp.broadcast_to(params["pos"][i][None, None, :], (T_i, B, pos_dim))
        embs.append(jnp.concatenate([pos, h], axis=-1))
        pads.append(~mask)
        seqs.append(jnp.transpose(mask, (1, 0))[:, :, None])
        globs.append(jnp.full((T_i,), bool(input_is_sequential[i]), jnp.bool_))
    emb = jnp.concatenate(embs, axis=0)
    seq = jnp.concatenate(seqs, axis=0)
    y = jnp.einsum("tbe,eh->tbh", emb, params["final_w"]) + params["final_b"][None]
    y = jax.nn.gelu(y, approximate=True) * seq.astype(jnp.float32)
    return y, jnp.concatenate(pads, axis=1), seq, jnp.concatenate(globs, axis=0)


# ----------------------------------------------------------------------------
# Deterministic parameter construction
# ----------------------------------------------------------------------------
def make_params(key, source_dims, hidden_dim, pos_dim):
    n = len(source_dims)
    keys = jax.random.split(key, 4 * n + 2)
    vec_w, vec_b, vec_wt, pos = [], [], [], []
    for i, d in enumerate(source_dims):
        vec_w.append(0.05 * jax.random.normal(keys[4 * i + 0], (d, hidden_dim), jnp.float32))
        vec_b.append(0.05 * jax.random.normal(keys[4 * i + 1], (1, hidden_dim), jnp.float32))
        vec_wt.append(0.05 * jax.random.normal(keys[4 * i + 2], (1, hidden_dim), jnp.float32))
        pos.append(0.05 * jax.random.normal(keys[4 * i + 3], (pos_dim,), jnp.float32))
    final_w = 0.05 * jax.random.normal(keys[-2], (pos_dim + hidden_dim, hidden_dim), jnp.float32)
    final_b = 0.05 * jax.random.normal(keys[-1], (1, hidden_dim), jnp.float32)
    return {
        "vec_w": vec_w, "vec_b": vec_b, "vec_wt": vec_wt, "pos": pos,
        "final_w": final_w, "final_b": final_b,
    }


if __name__ == "__main__":
    key = jax.random.PRNGKey(0)
    kp, k0, k1, kt = jax.random.split(key, 4)

    B = 2
    hidden_dim = 32
    pos_dim = 32

    # Source 0: sequential jets, T0=8, D0=16; Source 1: global MET, T1=1, D1=8.
    T0, D0 = 8, 16
    T1, D1 = 1, 8

    data0 = jax.random.normal(k0, (B, T0, D0), jnp.float32)
    data1 = jax.random.normal(k1, (B, T1, D1), jnp.float32)

    mask0 = jnp.array(
        [[True] * T0,
         [True] * 5 + [False] * (T0 - 5)], dtype=jnp.bool_)
    mask1 = jnp.ones((B, T1), dtype=jnp.bool_)

    source_time = jax.random.normal(kt, (B,), jnp.float32)

    sources = [(data0, mask0), (data1, mask1)]
    input_is_sequential = [True, False]

    params = make_params(kp, [D0, D1], hidden_dim, pos_dim)

    fwd = jax.jit(functools.partial(
        multi_input_vector_embedding, input_is_sequential=input_is_sequential))
    emb, padding_mask, sequence_mask, global_mask = fwd(params, sources, source_time)
    jax.block_until_ready((emb, padding_mask, sequence_mask, global_mask))

    T = T0 + T1
    assert emb.shape == (T, B, hidden_dim)
    assert padding_mask.shape == (B, T)
    assert sequence_mask.shape == (T, B, 1)
    assert global_mask.shape == (T,)
    # padded positions must be zeroed by the masked final block
    assert float(jnp.abs(emb[5:T0, 1, :]).max()) == 0.0

    # Compare against the unfused pure-JAX reference (same math, different fusion).
    ref_emb, ref_pad, ref_seq, ref_glob = _reference_forward(
        params, sources, source_time, input_is_sequential)
    assert bool(jnp.allclose(emb, ref_emb, atol=1e-2, rtol=1e-1))
    assert bool(jnp.array_equal(padding_mask, ref_pad))
    assert bool(jnp.array_equal(sequence_mask, ref_seq))
    assert bool(jnp.array_equal(global_mask, ref_glob))

    print("KERNEL_OK")
</pallas_src>

<mosaic_0001>
module attributes {stable_mosaic.version = 11 : i64} {
  func.func @_fused_embed_kernel(%arg0: i32, %arg1: memref<2xi32, #tpu.memory_space<smem>>, %arg2: memref<128x24xf32, #tpu.memory_space<vmem>>, %arg3: memref<1x24x32xf32, #tpu.memory_space<vmem>>, %arg4: memref<1x1x32xf32, #tpu.memory_space<vmem>>, %arg5: memref<32x32xf32, #tpu.memory_space<vmem>>, %arg6: memref<1x1x32xf32, #tpu.memory_space<vmem>>, %arg7: memref<128x1xf32, #tpu.memory_space<vmem>>, %arg8: memref<128x32xf32, #tpu.memory_space<vmem>>) attributes {dimension_semantics = [#tpu.dimension_semantics<parallel>], iteration_bounds = array<i64: 2>, scalar_prefetch = 1 : i64, scratch_operands = 0 : i64, tpu.core_type = #tpu.core_type<tc>, window_params = [{transform_indices = @transform_0, window_bounds = array<i64: 128, 24>}, {transform_indices = @transform_1, window_bounds = array<i64: 1, 24, 32>}, {transform_indices = @transform_2, window_bounds = array<i64: 1, 1, 32>}, {pipeline_mode = #tpu.pipeline_mode<synchronous>, transform_indices = @transform_3, window_bounds = array<i64: 32, 32>}, {transform_indices = @transform_4, window_bounds = array<i64: 1, 1, 32>}, {transform_indices = @transform_5, window_bounds = array<i64: 128, 1>}, {transform_indices = @transform_6, window_bounds = array<i64: 128, 32>}]} {
    %c0 = arith.constant 0 : index
    %c0_0 = arith.constant 0 : index
    %0 = vector.load %arg2[%c0, %c0_0] : memref<128x24xf32, #tpu.memory_space<vmem>>, vector<128x24xf32>
    %c0_1 = arith.constant 0 : index
    %c0_2 = arith.constant 0 : index
    %c0_3 = arith.constant 0 : index
    %1 = vector.load %arg3[%c0_1, %c0_2, %c0_3] : memref<1x24x32xf32, #tpu.memory_space<vmem>>, vector<1x24x32xf32>
    %2 = vector.shape_cast %1 : vector<1x24x32xf32> to vector<24x32xf32>
    %cst = arith.constant dense<0.000000e+00> : vector<128x32xf32>
    %3 = tpu.matmul %0, %2, %cst {dimension_numbers = #tpu.dot_dimension_numbers<[1], [0], [0], [1], [0, 0, 1, 1], [], []>} : vector<128x24xf32>, vector<24x32xf32>, vector<128x32xf32> -> vector<128x32xf32>
    %c0_4 = arith.constant 0 : index
    %c0_5 = arith.constant 0 : index
    %c0_6 = arith.constant 0 : index
    %4 = vector.load %arg4[%c0_4, %c0_5, %c0_6] : memref<1x1x32xf32, #tpu.memory_space<vmem>>, vector<1x1x32xf32>
    %5 = vector.shape_cast %4 : vector<1x1x32xf32> to vector<1x32xf32>
    %6 = vector.broadcast %5 : vector<1x32xf32> to vector<128x32xf32>
    %7 = arith.addf %3, %6 : vector<128x32xf32>
    %8 = arith.mulf %7, %7 : vector<128x32xf32>
    %9 = arith.mulf %7, %8 : vector<128x32xf32>
    %cst_7 = arith.constant 4.471500e-02 : f32
    %10 = vector.broadcast %cst_7 : f32 to vector<128x32xf32>
    %11 = arith.mulf %10, %9 : vector<128x32xf32>
    %12 = arith.addf %7, %11 : vector<128x32xf32>
    %cst_8 = arith.constant 0.797884583 : f32
    %13 = vector.broadcast %cst_8 : f32 to vector<128x32xf32>
    %14 = arith.mulf %13, %12 : vector<128x32xf32>
    %15 = math.tanh %14 : vector<128x32xf32>
    %cst_9 = arith.constant 1.000000e+00 : f32
    %16 = vector.broadcast %cst_9 : f32 to vector<128x32xf32>
    %17 = arith.addf %16, %15 : vector<128x32xf32>
    %cst_10 = arith.constant 5.000000e-01 : f32
    %18 = vector.broadcast %cst_10 : f32 to vector<128x32xf32>
    %19 = arith.mulf %18, %17 : vector<128x32xf32>
    %20 = arith.mulf %7, %19 : vector<128x32xf32>
    %c0_11 = arith.constant 0 : index
    %c0_12 = arith.constant 0 : index
    %21 = vector.load %arg5[%c0_11, %c0_12] : memref<32x32xf32, #tpu.memory_space<vmem>>, vector<32x32xf32>
    %cst_13 = arith.constant dense<0.000000e+00> : vector<128x32xf32>
    %22 = tpu.matmul %20, %21, %cst_13 {dimension_numbers = #tpu.dot_dimension_numbers<[1], [0], [0], [1], [0, 0, 1, 1], [], []>} : vector<128x32xf32>, vector<32x32xf32>, vector<128x32xf32> -> vector<128x32xf32>
    %c0_14 = arith.constant 0 : index
    %c0_15 = arith.constant 0 : index
    %c0_16 = arith.constant 0 : index
    %23 = vector.load %arg6[%c0_14, %c0_15, %c0_16] : memref<1x1x32xf32, #tpu.memory_space<vmem>>, vector<1x1x32xf32>
    %24 = vector.shape_cast %23 : vector<1x1x32xf32> to vector<1x32xf32>
    %25 = vector.broadcast %24 : vector<1x32xf32> to vector<128x32xf32>
    %26 = arith.addf %22, %25 : vector<128x32xf32>
    %27 = arith.mulf %26, %26 : vector<128x32xf32>
    %28 = arith.mulf %26, %27 : vector<128x32xf32>
    %cst_17 = arith.constant 4.471500e-02 : f32
    %29 = vector.broadcast %cst_17 : f32 to vector<128x32xf32>
    %30 = arith.mulf %29, %28 : vector<128x32xf32>
    %31 = arith.addf %26, %30 : vector<128x32xf32>
    %cst_18 = arith.constant 0.797884583 : f32
    %32 = vector.broadcast %cst_18 : f32 to vector<128x32xf32>
    %33 = arith.mulf %32, %31 : vector<128x32xf32>
    %34 = math.tanh %33 : vector<128x32xf32>
    %cst_19 = arith.constant 1.000000e+00 : f32
    %35 = vector.broadcast %cst_19 : f32 to vector<128x32xf32>
    %36 = arith.addf %35, %34 : vector<128x32xf32>
    %cst_20 = arith.constant 5.000000e-01 : f32
    %37 = vector.broadcast %cst_20 : f32 to vector<128x32xf32>
    %38 = arith.mulf %37, %36 : vector<128x32xf32>
    %39 = arith.mulf %26, %38 : vector<128x32xf32>
    %c0_21 = arith.constant 0 : index
    %c0_22 = arith.constant 0 : index
    %40 = vector.load %arg7[%c0_21, %c0_22] : memref<128x1xf32, #tpu.memory_space<vmem>>, vector<128x1xf32>
    %41 = vector.broadcast %40 : vector<128x1xf32> to vector<128x32xf32>
    %42 = arith.mulf %39, %41 : vector<128x32xf32>
    %c0_23 = arith.constant 0 : index
    %c0_24 = arith.constant 0 : index
    %43 = vector.load %arg8[%c0_23, %c0_24] : memref<128x32xf32, #tpu.memory_space<vmem>>, vector<128x32xf32>
    tpu.vector_store %arg8[%c0_23, %c0_24], %42 {strides = array<i32>} : memref<128x32xf32, #tpu.memory_space<vmem>>, vector<128x32xf32>,
    return
  }
  func.func @transform_0(%arg0: i32, %arg1: memref<2xi32, #tpu.memory_space<smem>>) -> (i32, i32) {
    %c0_i32 = arith.constant 0 : i32
    %c0_i32_0 = arith.constant 0 : i32
    return %arg0, %c0_i32 : i32, i32
  }
  func.func @transform_1(%arg0: i32, %arg1: memref<2xi32, #tpu.memory_space<smem>>) -> (i32, i32, i32) {
    %0 = arith.index_cast %arg0 : i32 to index
    %1 = memref.load %arg1[%0] : memref<2xi32, #tpu.memory_space<smem>>
    %c0_i32 = arith.constant 0 : i32
    %c0_i32_0 = arith.constant 0 : i32
    %c0_i32_1 = arith.constant 0 : i32
    return %1, %c0_i32, %c0_i32_0 : i32, i32, i32
  }
  func.func @transform_2(%arg0: i32, %arg1: memref<2xi32, #tpu.memory_space<smem>>) -> (i32, i32, i32) {
    %0 = arith.index_cast %arg0 : i32 to index
    %1 = memref.load %arg1[%0] : memref<2xi32, #tpu.memory_space<smem>>
    %c0_i32 = arith.constant 0 : i32
    %c0_i32_0 = arith.constant 0 : i32
    %c0_i32_1 = arith.constant 0 : i32
    return %1, %c0_i32, %c0_i32_0 : i32, i32, i32
  }
  func.func @transform_3(%arg0: i32, %arg1: memref<2xi32, #tpu.memory_space<smem>>) -> (i32, i32) {
    %c0_i32 = arith.constant 0 : i32
    %c0_i32_0 = arith.constant 0 : i32
    %c0_i32_1 = arith.constant 0 : i32
    return %c0_i32, %c0_i32_0 : i32, i32
  }
  func.func @transform_4(%arg0: i32, %arg1: memref<2xi32, #tpu.memory_space<smem>>) -> (i32, i32, i32) {
    %0 = arith.index_cast %arg0 : i32 to index
    %1 = memref.load %arg1[%0] : memref<2xi32, #tpu.memory_space<smem>>
    %c0_i32 = arith.constant 0 : i32
    %c0_i32_0 = arith.constant 0 : i32
    %c0_i32_1 = arith.constant 0 : i32
    return %1, %c0_i32, %c0_i32_0 : i32, i32, i32
  }
  func.func @transform_5(%arg0: i32, %arg1: memref<2xi32, #tpu.memory_space<smem>>) -> (i32, i32) {
    %c0_i32 = arith.constant 0 : i32
    %c0_i32_0 = arith.constant 0 : i32
    return %arg0, %c0_i32 : i32, i32
  }
  func.func @transform_6(%arg0: i32, %arg1: memref<2xi32, #tpu.memory_space<smem>>) -> (i32, i32) {
    %c0_i32 = arith.constant 0 : i32
    %c0_i32_0 = arith.constant 0 : i32
    return %arg0, %c0_i32 : i32, i32
  }
}

</mosaic_0001>

<llo_original>
// kernel: multi_input_vector_embedding.1
$region0: #{multi_input_vector_embedding.1}
  #allocation0 [shape = 'u32[]', space=smem, size = 0x4, offset = 0x4, fixed_abs, tag = 'smem constant byte address 0x4 - core index']
  #allocation1 [shape = 'u32[144,128]{1,0:T(1,128)}', space=vmem, size = 0x12000, scoped, tag = 'internal scratch']
  #allocation2 [shape = 's32[1]{0}', space=sflag, size = 0x4, scoped, tag = 'scoped memory for multi_input_vector_embedding.1']
  #allocation3 [shape = 'u8[512]{0}', space=smem, size = 0x200, scoped, tag = 'prefetched SMEM operand 0']
  %s0 = inlined_call_operand.vmem [shape: s32[2], index: 0, kind: input, shape index: {}]
  %s1 = inlined_call_operand.vmem [shape: f32[256,24], index: 1, kind: input, shape index: {}]
  %s2 = inlined_call_operand.vmem [shape: f32[2,24,32], index: 2, kind: input, shape index: {}]
  %s3 = inlined_call_operand.vmem [shape: f32[2,1,32], index: 3, kind: input, shape index: {}]
  %s4 = inlined_call_operand.vmem [shape: f32[32,32], index: 4, kind: input, shape index: {}]
  %s5 = inlined_call_operand.vmem [shape: f32[2,1,32], index: 5, kind: input, shape index: {}]
  %s6 = inlined_call_operand.vmem [shape: f32[256,1], index: 6, kind: input, shape index: {}]
  %s7 = inlined_call_operand.vmem [shape: f32[256,32], index: 7, kind: output, shape index: {}]
  %s8 = sld [smem:[#allocation0]]
  $region57: #{multi_input_vector_embedding.1} parent=0
    _
  %s10 = ssub.s32 1, %s8
  %s11 = scalar_select 0, %s10, %s8
  %s12 = sshll.u32 %s0, 4
  %s13 = int_to_ptr.vmem [resolvable:$true] %s12
  %15 = dma.vmem_to_smem %s13, 16, [#allocation3], [#allocation2]
  %16 = dma.done [#allocation2], 16
  %17 = sfence
  loop: start=0, step=1, limit=4
  $region2: #{multi_input_vector_embedding.1} parent=0 // loop_pre_header
    _
  $region3: #{multi_input_vector_embedding.1} parent=0 // loop_header
    %s19 = sphi 0, %s23
    %p20 = scmp.ge.s32.totalorder %s19, 4
    %s29 = sphi 0, %s31
    %s32 = sphi 0, %s29
    %s33 = sphi 0, %s32
    %s49 = sphi 0, %s33
    %s57 = sphi 0, %s59
    %s60 = sphi 0, %s57
    %s61 = sphi 0, %s60
    %s77 = sphi 0, %s61
    %s85 = sphi 0, %s87
    %s88 = sphi 0, %s85
    %s89 = sphi 0, %s88
    %s105 = sphi 0, %s89
    %s109 = sphi 0, %s109
    %s111 = sphi 0, %s109
    %s112 = sphi 0, %s111
    %s126 = sphi 0, %s112
    %s134 = sphi 0, %s136
    %s137 = sphi 0, %s134
    %s138 = sphi 0, %s137
    %s154 = sphi 0, %s138
    %s160 = sphi 0, %s162
    %s163 = sphi 0, %s160
    %s164 = sphi 0, %s163
    %s180 = sphi 0, %s164
    %s186 = sphi 0, %s188
    %s189 = sphi 0, %s186
    %s190 = sphi 0, %s189
    %s206 = sphi 0, %s190
  $region4: #{multi_input_vector_embedding.1} parent=0 // loop_header_branch
    %22 = sbr.rel (%p20) target = $region8
  $region5: #{multi_input_vector_embedding.1} parent=0 // loop_body
    %s24 = ssub.s32 %s19, 1
    %s25 = ssub.s32 %s19, 2
    %s26 = sadd.s32 %s19, 1
    %s27 = ssub.s32 %s19, %s26
    %p28 = scmp.eq.s32.totalorder %s27, 0
    %s30 = sadd.s32 %s29, 1
    %s31 = scalar_select %p28, %s29, %s30
    %p34 = pneg %p28
    %p35 = scmp.eq.s32.totalorder %s19, 1
    %p36 = por %p34, %p35
    %p37 = scmp.ne.s32.totalorder %s29, %s32
    %p38 = scmp.eq.s32.totalorder %s19, 0
    %p39 = por %p37, %p38
    %p40 = scmp.ne.s32.totalorder %s29, %s32
    %p41 = scmp.eq.s32.totalorder %s24, 1
    %p42 = por %p40, %p41
    %p43 = scmp.ne.s32.totalorder %s32, %s33
    %p44 = scmp.eq.s32.totalorder %s24, 0
    %p45 = por %p43, %p44
    %p46 = scmp.ne.s32.totalorder %s32, %s33
    %p47 = scmp.eq.s32.totalorder %s25, 1
    %p48 = por %p46, %p47
    %p50 = scmp.ne.s32.totalorder %s33, %s49
    %p51 = scmp.eq.s32.totalorder %s25, 0
    %p52 = por %p50, %p51
    %s53 = sld [smem:[#allocation3 + %s19]]
    %s54 = sld [smem:[#allocation3 + %s26]]
    %s55 = ssub.s32 %s53, %s54
    %p56 = scmp.eq.s32.totalorder %s55, 0
    %s58 = sadd.s32 %s57, 1
    %s59 = scalar_select %p56, %s57, %s58
    %p62 = pneg %p56
    %p63 = scmp.eq.s32.totalorder %s19, 1
    %p64 = por %p62, %p63
    %p65 = scmp.ne.s32.totalorder %s57, %s60
    %p66 = scmp.eq.s32.totalorder %s19, 0
    %p67 = por %p65, %p66
    %p68 = scmp.ne.s32.totalorder %s57, %s60
    %p69 = scmp.eq.s32.totalorder %s24, 1
    %p70 = por %p68, %p69
    %p71 = scmp.ne.s32.totalorder %s60, %s61
    %p72 = scmp.eq.s32.totalorder %s24, 0
    %p73 = por %p71, %p72
    %p74 = scmp.ne.s32.totalorder %s60, %s61
    %p75 = scmp.eq.s32.totalorder %s25, 1
    %p76 = por %p74, %p75
    %p78 = scmp.ne.s32.totalorder %s61, %s77
    %p79 = scmp.eq.s32.totalorder %s25, 0
    %p80 = por %p78, %p79
    %s81 = sld [smem:[#allocation3 + %s19]]
    %s82 = sld [smem:[#allocation3 + %s26]]
    %s83 = ssub.s32 %s81, %s82
    %p84 = scmp.eq.s32.totalorder %s83, 0
    %s86 = sadd.s32 %s85, 1
    %s87 = scalar_select %p84, %s85, %s86
    %p90 = pneg %p84
    %p91 = scmp.eq.s32.totalorder %s19, 1
    %p92 = por %p90, %p91
    %p93 = scmp.ne.s32.totalorder %s85, %s88
    %p94 = scmp.eq.s32.totalorder %s19, 0
    %p95 = por %p93, %p94
    %p96 = scmp.ne.s32.totalorder %s85, %s88
    %p97 = scmp.eq.s32.totalorder %s24, 1
    %p98 = por %p96, %p97
    %p99 = scmp.ne.s32.totalorder %s88, %s89
    %p100 = scmp.eq.s32.totalorder %s24, 0
    %p101 = por %p99, %p100
    %p102 = scmp.ne.s32.totalorder %s88, %s89
    %p103 = scmp.eq.s32.totalorder %s25, 1
    %p104 = por %p102, %p103
    %p106 = scmp.ne.s32.totalorder %s89, %s105
    %p107 = scmp.eq.s32.totalorder %s25, 0
    %p108 = por %p106, %p107
    %s110 = sadd.s32 %s109, 1
    %p113 = scmp.eq.s32.totalorder %s19, 1
    %p114 = scmp.ne.s32.totalorder %s109, %s111
    %p115 = scmp.eq.s32.totalorder %s19, 0
    %p116 = por %p114, %p115
    %p117 = scmp.ne.s32.totalorder %s109, %s111
    %p118 = scmp.eq.s32.totalorder %s24, 1
    %p119 = por %p117, %p118
    %p120 = scmp.ne.s32.totalorder %s111, %s112
    %p121 = scmp.eq.s32.totalorder %s24, 0
    %p122 = por %p120, %p121
    %p123 = scmp.ne.s32.totalorder %s111, %s112
    %p124 = scmp.eq.s32.totalorder %s25, 1
    %p125 = por %p123, %p124
    %p127 = scmp.ne.s32.totalorder %s112, %s126
    %p128 = scmp.eq.s32.totalorder %s25, 0
    %p129 = por %p127, %p128
    %s130 = sld [smem:[#allocation3 + %s19]]
    %s131 = sld [smem:[#allocation3 + %s26]]
    %s132 = ssub.s32 %s130, %s131
    %p133 = scmp.eq.s32.totalorder %s132, 0
    %s135 = sadd.s32 %s134, 1
    %s136 = scalar_select %p133, %s134, %s135
    %p139 = pneg %p133
    %p140 = scmp.eq.s32.totalorder %s19, 1
    %p141 = por %p139, %p140
    %p142 = scmp.ne.s32.totalorder %s134, %s137
    %p143 = scmp.eq.s32.totalorder %s19, 0
    %p144 = por %p142, %p143
    %p145 = scmp.ne.s32.totalorder %s134, %s137
    %p146 = scmp.eq.s32.totalorder %s24, 1
    %p147 = por %p145, %p146
    %p148 = scmp.ne.s32.totalorder %s137, %s138
    %p149 = scmp.eq.s32.totalorder %s24, 0
    %p150 = por %p148, %p149
    %p151 = scmp.ne.s32.totalorder %s137, %s138
    %p152 = scmp.eq.s32.totalorder %s25, 1
    %p153 = por %p151, %p152
    %p155 = scmp.ne.s32.totalorder %s138, %s154
    %p156 = scmp.eq.s32.totalorder %s25, 0
    %p157 = por %p155, %p156
    %s158 = ssub.s32 %s19, %s26
    %p159 = scmp.eq.s32.totalorder %s158, 0
    %s161 = sadd.s32 %s160, 1
    %s162 = scalar_select %p159, %s160, %s161
    %p165 = pneg %p159
    %p166 = scmp.eq.s32.totalorder %s19, 1
    %p167 = por %p165, %p166
    %p168 = scmp.ne.s32.totalorder %s160, %s163
    %p169 = scmp.eq.s32.totalorder %s19, 0
    %p170 = por %p168, %p169
    %p171 = scmp.ne.s32.totalorder %s160, %s163
    %p172 = scmp.eq.s32.totalorder %s24, 1
    %p173 = por %p171, %p172
    %p174 = scmp.ne.s32.totalorder %s163, %s164
    %p175 = scmp.eq.s32.totalorder %s24, 0
    %p176 = por %p174, %p175
    %p177 = scmp.ne.s32.totalorder %s163, %s164
    %p178 = scmp.eq.s32.totalorder %s25, 1
    %p179 = por %p177, %p178
    %p181 = scmp.ne.s32.totalorder %s164, %s180
    %p182 = scmp.eq.s32.totalorder %s25, 0
    %p183 = por %p181, %p182
    %s184 = ssub.s32 %s19, %s26
    %p185 = scmp.eq.s32.totalorder %s184, 0
    %s187 = sadd.s32 %s186, 1
    %s188 = scalar_select %p185, %s186, %s187
    %p191 = pneg %p185
    %p192 = scmp.eq.s32.totalorder %s19, 1
    %p193 = por %p191, %p192
    %p194 = scmp.ne.s32.totalorder %s186, %s189
    %p195 = scmp.eq.s32.totalorder %s19, 0
    %p196 = por %p194, %p195
    %p197 = scmp.ne.s32.totalorder %s186, %s189
    %p198 = scmp.eq.s32.totalorder %s24, 1
    %p199 = por %p197, %p198
    %p200 = scmp.ne.s32.totalorder %s189, %s190
    %p201 = scmp.eq.s32.totalorder %s24, 0
    %p202 = por %p200, %p201
    %p203 = scmp.ne.s32.totalorder %s189, %s190
    %p204 = scmp.eq.s32.totalorder %s25, 1
    %p205 = por %p203, %p204
    %p207 = scmp.ne.s32.totalorder %s190, %s206
    %p208 = scmp.eq.s32.totalorder %s25, 0
    %p209 = por %p207, %p208
    %p210 = scmp.le.s32.totalorder 1, %s19
    %p211 = scmp.lt.s32.totalorder %s19, 3
    %p212 = pnand %p210, %p211
    %p213 = pneg %p212
    // Predicated region
    $region9: #{multi_input_vector_embedding.1} parent=5 // pred_check
      _
    $region10: #{multi_input_vector_embedding.1} parent=5 // pred_check_branch
      %215 = sbr.rel (%p212) target = $region12
    $region11: #{multi_input_vector_embedding.1} parent=5 // pred_region
      %s216 = ssub.s32 %s19, 1
      // Predicated region
      $region13: #{multi_input_vector_embedding.1} parent=11 // pred_check
        %p217 = pneg %p122
      $region14: #{multi_input_vector_embedding.1} parent=11 // pred_check_branch
        %219 = sbr.rel (%p217) target = $region16
      $region15: #{multi_input_vector_embedding.1} parent=11 // pred_region
        _
      $region16: #{multi_input_vector_embedding.1} parent=11 // pred_fallthru
        _
    $region12: #{multi_input_vector_embedding.1} parent=5 // pred_fallthru
      _
    %p220 = scmp.lt.s32.totalorder %s19, 2
    // Predicated region
    $region17: #{multi_input_vector_embedding.1} parent=5 // pred_check
      %p221 = pneg %p220
    $region18: #{multi_input_vector_embedding.1} parent=5 // pred_check_branch
      %223 = sbr.rel (%p221) target = $region20
    $region19: #{multi_input_vector_embedding.1} parent=5 // pred_region
      // Predicated region
      $region21: #{multi_input_vector_embedding.1} parent=19 // pred_check
        %p224 = pneg %p39
      $region22: #{multi_input_vector_embedding.1} parent=19 // pred_check_branch
        %226 = sbr.rel (%p224) target = $region24
      $region23: #{multi_input_vector_embedding.1} parent=19 // pred_region
        %s227 = smul.u32 16, %s19
        %p228 = scmp.lt.s32.totalorder %s227, 31
        %s229 = scalar_select %p228, %s227, 31
        %s230 = smul.addr %s229, 8
        %s231 = scalar_lea.vmem %s1, %s230
        %s232 = smul.u32 16, %s19
      $region24: #{multi_input_vector_embedding.1} parent=19 // pred_fallthru
        _
      // Predicated region
      $region25: #{multi_input_vector_embedding.1} parent=19 // pred_check
        %p233 = pneg %p67
      $region26: #{multi_input_vector_embedding.1} parent=19 // pred_check_branch
        %235 = sbr.rel (%p233) target = $region28
      $region27: #{multi_input_vector_embedding.1} parent=19 // pred_region
        %s236 = sld [smem:[#allocation3 + %s19]]
        %p237 = scmp.lt.s32.totalorder %s236, 1
        %s238 = scalar_select %p237, %s236, 1
        %s239 = smul.addr %s238, 3
        %s240 = smul.addr %s239, 8
        %s241 = scalar_lea.vmem %s2, %s240
        %s242 = sld [smem:[#allocation3 + %s19]]
      $region28: #{multi_input_vector_embedding.1} parent=19 // pred_fallthru
        _
      // Predicated region
      $region29: #{multi_input_vector_embedding.1} parent=19 // pred_check
        %p243 = pneg %p95
      $region30: #{multi_input_vector_embedding.1} parent=19 // pred_check_branch
        %245 = sbr.rel (%p243) target = $region32
      $region31: #{multi_input_vector_embedding.1} parent=19 // pred_region
        %s246 = sld [smem:[#allocation3 + %s19]]
        %p247 = scmp.lt.s32.totalorder %s246, 1
        %s248 = scalar_select %p247, %s246, 1
        %s249 = scalar_lea.vmem %s3, %s248
        %s250 = sld [smem:[#allocation3 + %s19]]
      $region32: #{multi_input_vector_embedding.1} parent=19 // pred_fallthru
        _
      // Predicated region
      $region33: #{multi_input_vector_embedding.1} parent=19 // pred_check
        %p251 = pneg %p144
      $region34: #{multi_input_vector_embedding.1} parent=19 // pred_check_branch
        %253 = sbr.rel (%p251) target = $region36
      $region35: #{multi_input_vector_embedding.1} parent=19 // pred_region
        %s254 = sld [smem:[#allocation3 + %s19]]
        %p255 = scmp.lt.s32.totalorder %s254, 1
        %s256 = scalar_select %p255, %s254, 1
        %s257 = scalar_lea.vmem %s5, %s256
        %s258 = sld [smem:[#allocation3 + %s19]]
      $region36: #{multi_input_vector_embedding.1} parent=19 // pred_fallthru
        _
      // Predicated region
      $region37: #{multi_input_vector_embedding.1} parent=19 // pred_check
        %p259 = pneg %p170
      $region38: #{multi_input_vector_embedding.1} parent=19 // pred_check_branch
        %261 = sbr.rel (%p259) target = $region40
      $region39: #{multi_input_vector_embedding.1} parent=19 // pred_region
        %s262 = smul.u32 16, %s19
        %p263 = scmp.lt.s32.totalorder %s262, 31
        %s264 = scalar_select %p263, %s262, 31
        %s265 = smul.addr %s264, 8
        %s266 = scalar_lea.vmem %s6, %s265
        %s267 = smul.u32 16, %s19
      $region40: #{multi_input_vector_embedding.1} parent=19 // pred_fallthru
        _
    $region20: #{multi_input_vector_embedding.1} parent=5 // pred_fallthru
      _
    %p268 = scmp.le.s32.totalorder 1, %s19
    %p269 = scmp.lt.s32.totalorder %s19, 3
    %p270 = pnand %p268, %p269
    %p271 = pneg %p270
    // Predicated region
    $region41: #{multi_input_vector_embedding.1} parent=5 // pred_check
      _
    $region42: #{multi_input_vector_embedding.1} parent=5 // pred_check_branch
      %273 = sbr.rel (%p270) target = $region44
    $region43: #{multi_input_vector_embedding.1} parent=5 // pred_region
      %s274 = ssub.s32 %s19, 1
      %s275 = smul.u32 16, %s24
      %p276 = scmp.lt.s32.totalorder %s275, 31
      %s277 = scalar_select %p276, %s275, 31
      %s278 = smul.addr %s277, 8
      %s279 = scalar_lea.vmem %s1, %s278
      %p280 = pneg %p45
      %p281 = pneg %p42
      %s282 = sld [smem:[#allocation3 + %s24]]
      %p283 = scmp.lt.s32.totalorder %s282, 1
      %s284 = scalar_select %p283, %s282, 1
      %s285 = smul.addr %s284, 3
      %s286 = smul.addr %s285, 8
      %s287 = scalar_lea.vmem %s2, %s286
      %p288 = pneg %p73
      %p289 = pneg %p70
      %s290 = sld [smem:[#allocation3 + %s24]]
      %p291 = scmp.lt.s32.totalorder %s290, 1
      %s292 = scalar_select %p291, %s290, 1
      %s293 = scalar_lea.vmem %s3, %s292
      %p294 = pneg %p101
      %p295 = pneg %p98
      %p296 = pneg %p122
      %p297 = pneg %p119
      %s298 = sld [smem:[#allocation3 + %s24]]
      %p299 = scmp.lt.s32.totalorder %s298, 1
      %s300 = scalar_select %p299, %s298, 1
      %s301 = scalar_lea.vmem %s5, %s300
      %p302 = pneg %p150
      %p303 = pneg %p147
      %s304 = smul.u32 16, %s24
      %p305 = scmp.lt.s32.totalorder %s304, 31
      %s306 = scalar_select %p305, %s304, 31
      %s307 = smul.addr %s306, 8
      %s308 = scalar_lea.vmem %s6, %s307
      %p309 = pneg %p176
      %p310 = pneg %p173
      %p311 = pneg %p202
      %p312 = pneg %p199
      %s313 = smul.u32 16, %s24
      %p314 = scmp.lt.s32.totalorder %s313, 31
      %s315 = scalar_select %p314, %s313, 31
      %s316 = smul.addr %s315, 8
      %s317 = scalar_lea.vmem %s7, %s316
      %s318 = smul.u32 16, %s24
      %p319 = scmp.lt.s32.totalorder %s318, 31
      %s320 = scalar_select %p319, %s318, 31
      %s321 = smul.addr %s320, 8
      %s322 = scalar_lea.vmem %s1, %s321
      %s323 = smul.u32 16, %s24
      %s324 = sld [smem:[#allocation3 + %s24]]
      %p325 = scmp.lt.s32.totalorder %s324, 1
      %s326 = scalar_select %p325, %s324, 1
      %s327 = smul.addr %s326, 3
      %s328 = smul.addr %s327, 8
      %s329 = scalar_lea.vmem %s2, %s328
      %s330 = sld [smem:[#allocation3 + %s24]]
      %s331 = sld [smem:[#allocation3 + %s24]]
      %p332 = scmp.lt.s32.totalorder %s331, 1
      %s333 = scalar_select %p332, %s331, 1
      %s334 = scalar_lea.vmem %s3, %s333
      %s335 = sld [smem:[#allocation3 + %s24]]
      %s336 = sld [smem:[#allocation3 + %s24]]
      %p337 = scmp.lt.s32.totalorder %s336, 1
      %s338 = scalar_select %p337, %s336, 1
      %s339 = scalar_lea.vmem %s5, %s338
      %s340 = sld [smem:[#allocation3 + %s24]]
      %s341 = smul.u32 16, %s24
      %p342 = scmp.lt.s32.totalorder %s341, 31
      %s343 = scalar_select %p342, %s341, 31
      %s344 = smul.addr %s343, 8
      %s345 = scalar_lea.vmem %s6, %s344
      %s346 = smul.u32 16, %s24
      %s347 = smul.u32 16, %s24
      %p348 = scmp.lt.s32.totalorder %s347, 31
      %s349 = scalar_select %p348, %s347, 31
      %s350 = smul.addr %s349, 8
      %s351 = scalar_lea.vmem %s7, %s350
      %s352 = smul.u32 16, %s24
      %v353 = vld [vmem:[%s322] sm:$0xff]
      %v354 = vld [vmem:[%s322 + $0x8] sm:$0xff]
      %v355 = vld [vmem:[%s322 + $0x10] sm:$0xff]
      %v356 = vld [vmem:[%s322 + $0x18] sm:$0xff]
      %v357 = vld [vmem:[%s322 + $0x20] sm:$0xff]
      %v358 = vld [vmem:[%s322 + $0x28] sm:$0xff]
      %v359 = vld [vmem:[%s322 + $0x30] sm:$0xff]
      %v360 = vld [vmem:[%s322 + $0x38] sm:$0xff]
      %v361 = vld [vmem:[%s322 + $0x40] sm:$0xff]
      %v362 = vld [vmem:[%s322 + $0x48] sm:$0xff]
      %v363 = vld [vmem:[%s322 + $0x50] sm:$0xff]
      %v364 = vld [vmem:[%s322 + $0x58] sm:$0xff]
      %v365 = vld [vmem:[%s322 + $0x60] sm:$0xff]
      %v366 = vld [vmem:[%s322 + $0x68] sm:$0xff]
      %v367 = vld [vmem:[%s322 + $0x70] sm:$0xff]
      %v368 = vld [vmem:[%s322 + $0x78] sm:$0xff]
      %v369 = vld [vmem:[%s329] sm:$0xff]
      %v370 = vld [vmem:[%s329 + $0x8] sm:$0xff]
      %v371 = vld [vmem:[%s329 + $0x10] sm:$0xff]
      %v372 = vld [vmem:[%s334] sm:$0x1]
      %v374 = vlaneseq
      %v375 = vshrl.u32 %v374, 7
      %v376 = vsub.s32 0, %v375
      %v377 = vrot.slane %v372, %v376
      %vm379 = vcmask 195584
      %v381 = vsel %vm379, %v353, 0
      %v384 = vsel %vm379, %v354, 0
      %v387 = vsel %vm379, %v355, 0
      %v390 = vsel %vm379, %v356, 0
      %v393 = vsel %vm379, %v357, 0
      %v396 = vsel %vm379, %v358, 0
      %v399 = vsel %vm379, %v359, 0
      %v402 = vsel %vm379, %v360, 0
      %v405 = vsel %vm379, %v361, 0
      %v408 = vsel %vm379, %v362, 0
      %v411 = vsel %vm379, %v363, 0
      %v414 = vsel %vm379, %v364, 0
      %v417 = vsel %vm379, %v365, 0
      %v420 = vsel %vm379, %v366, 0
      %v423 = vsel %vm379, %v367, 0
      %v426 = vsel %vm379, %v368, 0
      %428 = vmatprep.subr.mxu0 0.0
      %429 = vmatpush1.msra.mxu0 0.0
      %430 = vmatprep.subr.mxu0 0.0
      %431 = vmatpush1.msra.mxu0 0.0
      %432 = vmatprep.subr.mxu0 0.0
      %433 = vmatpush1.msra.mxu0 0.0
      %434 = vmatprep.subr.mxu0 0.0
      %435 = vmatpush1.msra.mxu0 0.0
      %436 = vmatprep.subr.mxu0 0.0
      %437 = vmatpush1.msra.mxu0 0.0
      %438 = vmatprep.subr.mxu0 0.0
      %439 = vmatpush1.msra.mxu0 0.0
      %440 = vmatprep.subr.mxu0 0.0
      %441 = vmatpush1.msra.mxu0 0.0
      %442 = vmatprep.subr.mxu0 0.0
      %443 = vmatpush1.msra.mxu0 0.0
      %444 = vmatprep.subr.mxu0 0.0
      %445 = vmatpush1.msra.mxu0 0.0
      %446 = vmatprep.subr.mxu0 0.0
      %447 = vmatpush1.msra.mxu0 0.0
      %448 = vmatprep.subr.mxu0 0.0
      %449 = vmatpush1.msra.mxu0 0.0
      %450 = vmatprep.subr.mxu0 0.0
      %451 = vmatpush1.msra.mxu0 0.0
      %452 = vmatprep.subr.mxu0 0.0
      %453 = vmatpush1.msra.mxu0 0.0
      %454 = vmatprep.subr.mxu0 0.0
      %455 = vmatpush1.msra.mxu0 %v371
      %456 = vmatprep.subr.mxu0 0.0
      %457 = vmatpush1.msra.mxu0 %v370
      %458 = vmatprep.subr.mxu0 0.0
      %459 = vmatpush1.msra.mxu0 %v369
      %460 = vmatprep.subr.mxu0 0.0
      %461 = vmatpush2.msra.mxu0 0.0
      %462 = vmatprep.subr.mxu0 0.0
      %463 = vmatpush2.msra.mxu0 0.0
      %464 = vmatprep.subr.mxu0 0.0
      %465 = vmatpush2.msra.mxu0 0.0
      %466 = vmatprep.subr.mxu0 0.0
      %467 = vmatpush2.msra.mxu0 0.0
      %468 = vmatprep.subr.mxu0 0.0
      %469 = vmatpush2.msra.mxu0 0.0
      %470 = vmatprep.subr.mxu0 0.0
      %471 = vmatpush2.msra.mxu0 0.0
      %472 = vmatprep.subr.mxu0 0.0
      %473 = vmatpush2.msra.mxu0 0.0
      %474 = vmatprep.subr.mxu0 0.0
      %475 = vmatpush2.msra.mxu0 0.0
      %476 = vmatprep.subr.mxu0 0.0
      %477 = vmatpush2.msra.mxu0 0.0
      %478 = vmatprep.subr.mxu0 0.0
      %479 = vmatpush2.msra.mxu0 0.0
      %480 = vmatprep.subr.mxu0 0.0
      %481 = vmatpush2.msra.mxu0 0.0
      %482 = vmatprep.subr.mxu0 0.0
      %483 = vmatpush2.msra.mxu0 0.0
      %484 = vmatprep.subr.mxu0 0.0
      %485 = vmatpush2.msra.mxu0 0.0
      %486 = vmatprep.subr.mxu0 0.0
      %487 = vmatpush2.msra.mxu0 0.0
      %488 = vmatprep.subr.mxu0 0.0
      %489 = vmatpush2.msra.mxu0 0.0
      %490 = vmatprep.subr.mxu0 0.0
      %491 = vmatpush2.msra.mxu0 0.0
      %492 = vmatprep.mubr.f32.mxu0 0.0
      %493 = vmatmul.mubr.f32.gmra.mxu0 %v381
      %v494 = vpop.f32.mrf.mxu0
      %v495 = vadd.f32 %v377, %v494
      %v496 = vpop.f32.mrf.mxu0
      %497 = vmatprep.mubr.f32.mxu0 0.0
      %498 = vmatmul.mubr.f32.gmra.mxu0 %v384
      %v499 = vpop.f32.mrf.mxu0
      %v500 = vadd.f32 %v377, %v499
      %v501 = vpop.f32.mrf.mxu0
      %502 = vmatprep.mubr.f32.mxu0 0.0
      %503 = vmatmul.mubr.f32.gmra.mxu0 %v387
      %v504 = vpop.f32.mrf.mxu0
      %v505 = vadd.f32 %v377, %v504
      %v506 = vpop.f32.mrf.mxu0
      %507 = vmatprep.mubr.f32.mxu0 0.0
      %508 = vmatmul.mubr.f32.gmra.mxu0 %v390
      %v509 = vpop.f32.mrf.mxu0
      %v510 = vadd.f32 %v377, %v509
      %v511 = vpop.f32.mrf.mxu0
      %512 = vmatprep.mubr.f32.mxu0 0.0
      %513 = vmatmul.mubr.f32.gmra.mxu0 %v393
      %v514 = vpop.f32.mrf.mxu0
      %v515 = vadd.f32 %v377, %v514
      %v516 = vpop.f32.mrf.mxu0
      %517 = vmatprep.mubr.f32.mxu0 0.0
      %518 = vmatmul.mubr.f32.gmra.mxu0 %v396
      %v519 = vpop.f32.mrf.mxu0
      %v520 = vadd.f32 %v377, %v519
      %v521 = vpop.f32.mrf.mxu0
      %522 = vmatprep.mubr.f32.mxu0 0.0
      %523 = vmatmul.mubr.f32.gmra.mxu0 %v399
      %v524 = vpop.f32.mrf.mxu0
      %v525 = vadd.f32 %v377, %v524
      %v526 = vpop.f32.mrf.mxu0
      %527 = vmatprep.mubr.f32.mxu0 0.0
      %528 = vmatmul.mubr.f32.gmra.mxu0 %v402
      %v529 = vpop.f32.mrf.mxu0
      %v530 = vadd.f32 %v377, %v529
      %v531 = vpop.f32.mrf.mxu0
      %532 = vmatprep.mubr.f32.mxu0 0.0
      %533 = vmatmul.mubr.f32.gmra.mxu0 %v405
      %v534 = vpop.f32.mrf.mxu0
      %v535 = vadd.f32 %v377, %v534
      %v536 = vpop.f32.mrf.mxu0
      %537 = vmatprep.mubr.f32.mxu0 0.0
      %538 = vmatmul.mubr.f32.gmra.mxu0 %v408
      %v539 = vpop.f32.mrf.mxu0
      %v540 = vadd.f32 %v377, %v539
      %v541 = vpop.f32.mrf.mxu0
      %542 = vmatprep.mubr.f32.mxu0 0.0
      %543 = vmatmul.mubr.f32.gmra.mxu0 %v411
      %v544 = vpop.f32.mrf.mxu0
      %v545 = vadd.f32 %v377, %v544
      %v546 = vpop.f32.mrf.mxu0
      %547 = vmatprep.mubr.f32.mxu0 0.0
      %548 = vmatmul.mubr.f32.gmra.mxu0 %v414
      %v549 = vpop.f32.mrf.mxu0
      %v550 = vadd.f32 %v377, %v549
      %v551 = vpop.f32.mrf.mxu0
      %552 = vmatprep.mubr.f32.mxu0 0.0
      %553 = vmatmul.mubr.f32.gmra.mxu0 %v417
      %v554 = vpop.f32.mrf.mxu0
      %v555 = vadd.f32 %v377, %v554
      %v556 = vpop.f32.mrf.mxu0
      %557 = vmatprep.mubr.f32.mxu0 0.0
      %558 = vmatmul.mubr.f32.gmra.mxu0 %v420
      %v559 = vpop.f32.mrf.mxu0
      %v560 = vadd.f32 %v377, %v559
      %v561 = vpop.f32.mrf.mxu0
      %562 = vmatprep.mubr.f32.mxu0 0.0
      %563 = vmatmul.mubr.f32.gmra.mxu0 %v423
      %v564 = vpop.f32.mrf.mxu0
      %v565 = vadd.f32 %v377, %v564
      %v566 = vpop.f32.mrf.mxu0
      %567 = vmatprep.mubr.f32.mxu0 0.0
      %568 = vmatmul.mubr.f32.gmra.mxu0 %v426
      %v569 = vpop.f32.mrf.mxu0
      %v570 = vadd.f32 %v377, %v569
      %v571 = vpop.f32.mrf.mxu0
      %572 = vdwg.mxu0
      %v573 = vmul.f32 %v495, %v495
      %v574 = vmul.f32 %v500, %v500
      %v575 = vmul.f32 %v505, %v505
      %v576 = vmul.f32 %v510, %v510
      %v577 = vmul.f32 %v515, %v515
      %v578 = vmul.f32 %v520, %v520
      %v579 = vmul.f32 %v525, %v525
      %v580 = vmul.f32 %v530, %v530
      %v581 = vmul.f32 %v535, %v535
      %v582 = vmul.f32 %v540, %v540
      %v583 = vmul.f32 %v545, %v545
      %v584 = vmul.f32 %v550, %v550
      %v585 = vmul.f32 %v555, %v555
      %v586 = vmul.f32 %v560, %v560
      %v587 = vmul.f32 %v565, %v565
      %v588 = vmul.f32 %v570, %v570
      %v589 = vmul.f32 %v495, %v573
      %v590 = vmul.f32 %v500, %v574
      %v591 = vmul.f32 %v505, %v575
      %v592 = vmul.f32 %v510, %v576
      %v593 = vmul.f32 %v515, %v577
      %v594 = vmul.f32 %v520, %v578
      %v595 = vmul.f32 %v525, %v579
      %v596 = vmul.f32 %v530, %v580
      %v597 = vmul.f32 %v535, %v581
      %v598 = vmul.f32 %v540, %v582
      %v599 = vmul.f32 %v545, %v583
      %v600 = vmul.f32 %v550, %v584
      %v601 = vmul.f32 %v555, %v585
      %v602 = vmul.f32 %v560, %v586
      %v603 = vmul.f32 %v565, %v587
      %v604 = vmul.f32 %v570, %v588
      %v605 = vmul.f32 %v589, 0.044715
      %v606 = vmul.f32 %v590, 0.044715
      %v607 = vmul.f32 %v591, 0.044715
      %v608 = vmul.f32 %v592, 0.044715
      %v609 = vmul.f32 %v593, 0.044715
      %v610 = vmul.f32 %v594, 0.044715
      %v611 = vmul.f32 %v595, 0.044715
      %v612 = vmul.f32 %v596, 0.044715
      %v613 = vmul.f32 %v597, 0.044715
      %v614 = vmul.f32 %v598, 0.044715
      %v615 = vmul.f32 %v599, 0.044715
      %v616 = vmul.f32 %v600, 0.044715
      %v617 = vmul.f32 %v601, 0.044715
      %v618 = vmul.f32 %v602, 0.044715
      %v619 = vmul.f32 %v603, 0.044715
      %v620 = vmul.f32 %v604, 0.044715
      %v621 = vadd.f32 %v495, %v605
      %v622 = vadd.f32 %v500, %v606
      %v623 = vadd.f32 %v505, %v607
      %v624 = vadd.f32 %v510, %v608
      %v625 = vadd.f32 %v515, %v609
      %v626 = vadd.f32 %v520, %v610
      %v627 = vadd.f32 %v525, %v611
      %v628 = vadd.f32 %v530, %v612
      %v629 = vadd.f32 %v535, %v613
      %v630 = vadd.f32 %v540, %v614
      %v631 = vadd.f32 %v545, %v615
      %v632 = vadd.f32 %v550, %v616
      %v633 = vadd.f32 %v555, %v617
      %v634 = vadd.f32 %v560, %v618
      %v635 = vadd.f32 %v565, %v619
      %v636 = vadd.f32 %v570, %v620
      %v637 = vmul.f32 %v621, 0.7978846
      %v638 = vmul.f32 %v622, 0.7978846
      %v639 = vmul.f32 %v623, 0.7978846
      %v640 = vmul.f32 %v624, 0.7978846
      %v641 = vmul.f32 %v625, 0.7978846
      %v642 = vmul.f32 %v626, 0.7978846
      %v643 = vmul.f32 %v627, 0.7978846
      %v644 = vmul.f32 %v628, 0.7978846
      %v645 = vmul.f32 %v629, 0.7978846
      %v646 = vmul.f32 %v630, 0.7978846
      %v647 = vmul.f32 %v631, 0.7978846
      %v648 = vmul.f32 %v632, 0.7978846
      %v649 = vmul.f32 %v633, 0.7978846
      %v650 = vmul.f32 %v634, 0.7978846
      %v651 = vmul.f32 %v635, 0.7978846
      %v652 = vmul.f32 %v636, 0.7978846
      %v653 = vtanh.pop %v637
      %v654 = vtanh.pop %v638
      %v655 = vtanh.pop %v639
      %v656 = vtanh.pop %v640
      %v657 = vtanh.pop %v641
      %v658 = vtanh.pop %v642
      %v659 = vtanh.pop %v643
      %v660 = vtanh.pop %v644
      %v661 = vtanh.pop %v645
      %v662 = vtanh.pop %v646
      %v663 = vtanh.pop %v647
      %v664 = vtanh.pop %v648
      %v665 = vtanh.pop %v649
      %v666 = vtanh.pop %v650
      %v667 = vtanh.pop %v651
      %v668 = vtanh.pop %v652
      %v669 = vadd.f32 %v653, 1.0
      %v670 = vadd.f32 %v654, 1.0
      %v671 = vadd.f32 %v655, 1.0
      %v672 = vadd.f32 %v656, 1.0
      %v673 = vadd.f32 %v657, 1.0
      %v674 = vadd.f32 %v658, 1.0
      %v675 = vadd.f32 %v659, 1.0
      %v676 = vadd.f32 %v660, 1.0
      %v677 = vadd.f32 %v661, 1.0
      %v678 = vadd.f32 %v662, 1.0
      %v679 = vadd.f32 %v663, 1.0
      %v680 = vadd.f32 %v664, 1.0
      %v681 = vadd.f32 %v665, 1.0
      %v682 = vadd.f32 %v666, 1.0
      %v683 = vadd.f32 %v667, 1.0
      %v684 = vadd.f32 %v668, 1.0
      %v685 = vmul.f32 %v669, 0.5
      %v686 = vmul.f32 %v670, 0.5
      %v687 = vmul.f32 %v671, 0.5
      %v688 = vmul.f32 %v672, 0.5
      %v689 = vmul.f32 %v673, 0.5
      %v690 = vmul.f32 %v674, 0.5
      %v691 = vmul.f32 %v675, 0.5
      %v692 = vmul.f32 %v676, 0.5
      %v693 = vmul.f32 %v677, 0.5
      %v694 = vmul.f32 %v678, 0.5
      %v695 = vmul.f32 %v679, 0.5
      %v696 = vmul.f32 %v680, 0.5
      %v697 = vmul.f32 %v681, 0.5
      %v698 = vmul.f32 %v682, 0.5
      %v699 = vmul.f32 %v683, 0.5
      %v700 = vmul.f32 %v684, 0.5
      %v701 = vmul.f32 %v495, %v685
      %v702 = vmul.f32 %v500, %v686
      %v703 = vmul.f32 %v505, %v687
      %v704 = vmul.f32 %v510, %v688
      %v705 = vmul.f32 %v515, %v689
      %v706 = vmul.f32 %v520, %v690
      %v707 = vmul.f32 %v525, %v691
      %v708 = vmul.f32 %v530, %v692
      %v709 = vmul.f32 %v535, %v693
      %v710 = vmul.f32 %v540, %v694
      %v711 = vmul.f32 %v545, %v695
      %v712 = vmul.f32 %v550, %v696
      %v713 = vmul.f32 %v555, %v697
      %v714 = vmul.f32 %v560, %v698
      %v715 = vmul.f32 %v565, %v699
      %v716 = vmul.f32 %v570, %v700
      %v717 = vld [vmem:[%s4] sm:$0xff]
      %v718 = vld [vmem:[%s4 + $0x8] sm:$0xff]
      %v719 = vld [vmem:[%s4 + $0x10] sm:$0xff]
      %v720 = vld [vmem:[%s4 + $0x18] sm:$0xff]
      %v721 = vld [vmem:[%s339] sm:$0x1]
      %v723 = vlaneseq
      %v724 = vshrl.u32 %v723, 7
      %v725 = vsub.s32 0, %v724
      %v726 = vrot.slane %v721, %v725
      %vm728 = vcmask 261120
      %v730 = vsel %vm728, %v701, 0
      %v733 = vsel %vm728, %v702, 0
      %v736 = vsel %vm728, %v703, 0
      %v739 = vsel %vm728, %v704, 0
      %v742 = vsel %vm728, %v705, 0
      %v745 = vsel %vm728, %v706, 0
      %v748 = vsel %vm728, %v707, 0
      %v751 = vsel %vm728, %v708, 0
      %v754 = vsel %vm728, %v709, 0
      %v757 = vsel %vm728, %v710, 0
      %v760 = vsel %vm728, %v711, 0
      %v763 = vsel %vm728, %v712, 0
      %v766 = vsel %vm728, %v713, 0
      %v769 = vsel %vm728, %v714, 0
      %v772 = vsel %vm728, %v715, 0
      %v775 = vsel %vm728, %v716, 0
      %777 = vmatprep.subr.mxu0 0.0
      %778 = vmatpush1.msra.mxu0 0.0
      %779 = vmatprep.subr.mxu0 0.0
      %780 = vmatpush1.msra.mxu0 0.0
      %781 = vmatprep.subr.mxu0 0.0
      %782 = vmatpush1.msra.mxu0 0.0
      %783 = vmatprep.subr.mxu0 0.0
      %784 = vmatpush1.msra.mxu0 0.0
      %785 = vmatprep.subr.mxu0 0.0
      %786 = vmatpush1.msra.mxu0 0.0
      %787 = vmatprep.subr.mxu0 0.0
      %788 = vmatpush1.msra.mxu0 0.0
      %789 = vmatprep.subr.mxu0 0.0
      %790 = vmatpush1.msra.mxu0 0.0
      %791 = vmatprep.subr.mxu0 0.0
      %792 = vmatpush1.msra.mxu0 0.0
      %793 = vmatprep.subr.mxu0 0.0
      %794 = vmatpush1.msra.mxu0 0.0
      %795 = vmatprep.subr.mxu0 0.0
      %796 = vmatpush1.msra.mxu0 0.0
      %797 = vmatprep.subr.mxu0 0.0
      %798 = vmatpush1.msra.mxu0 0.0
      %799 = vmatprep.subr.mxu0 0.0
      %800 = vmatpush1.msra.mxu0 0.0
      %801 = vmatprep.subr.mxu0 0.0
      %802 = vmatpush1.msra.mxu0 %v720
      %803 = vmatprep.subr.mxu0 0.0
      %804 = vmatpush1.msra.mxu0 %v719
      %805 = vmatprep.subr.mxu0 0.0
      %806 = vmatpush1.msra.mxu0 %v718
      %807 = vmatprep.subr.mxu0 0.0
      %808 = vmatpush1.msra.mxu0 %v717
      %809 = vmatprep.subr.mxu0 0.0
      %810 = vmatpush2.msra.mxu0 0.0
      %811 = vmatprep.subr.mxu0 0.0
      %812 = vmatpush2.msra.mxu0 0.0
      %813 = vmatprep.subr.mxu0 0.0
      %814 = vmatpush2.msra.mxu0 0.0
      %815 = vmatprep.subr.mxu0 0.0
      %816 = vmatpush2.msra.mxu0 0.0
      %817 = vmatprep.subr.mxu0 0.0
      %818 = vmatpush2.msra.mxu0 0.0
      %819 = vmatprep.subr.mxu0 0.0
      %820 = vmatpush2.msra.mxu0 0.0
      %821 = vmatprep.subr.mxu0 0.0
      %822 = vmatpush2.msra.mxu0 0.0
      %823 = vmatprep.subr.mxu0 0.0
      %824 = vmatpush2.msra.mxu0 0.0
      %825 = vmatprep.subr.mxu0 0.0
      %826 = vmatpush2.msra.mxu0 0.0
      %827 = vmatprep.subr.mxu0 0.0
      %828 = vmatpush2.msra.mxu0 0.0
      %829 = vmatprep.subr.mxu0 0.0
      %830 = vmatpush2.msra.mxu0 0.0
      %831 = vmatprep.subr.mxu0 0.0
      %832 = vmatpush2.msra.mxu0 0.0
      %833 = vmatprep.subr.mxu0 0.0
      %834 = vmatpush2.msra.mxu0 0.0
      %835 = vmatprep.subr.mxu0 0.0
      %836 = vmatpush2.msra.mxu0 0.0
      %837 = vmatprep.subr.mxu0 0.0
      %838 = vmatpush2.msra.mxu0 0.0
      %839 = vmatprep.subr.mxu0 0.0
      %840 = vmatpush2.msra.mxu0 0.0
      %841 = vmatprep.mubr.f32.mxu0 0.0
      %842 = vmatmul.mubr.f32.gmra.mxu0 %v730
      %v843 = vpop.f32.mrf.mxu0
      %v844 = vadd.f32 %v726, %v843
      %v845 = vpop.f32.mrf.mxu0
      %846 = vmatprep.mubr.f32.mxu0 0.0
      %847 = vmatmul.mubr.f32.gmra.mxu0 %v733
      %v848 = vpop.f32.mrf.mxu0
      %v849 = vadd.f32 %v726, %v848
      %v850 = vpop.f32.mrf.mxu0
      %851 = vmatprep.mubr.f32.mxu0 0.0
      %852 = vmatmul.mubr.f32.gmra.mxu0 %v736
      %v853 = vpop.f32.mrf.mxu0
      %v854 = vadd.f32 %v726, %v853
      %v855 = vpop.f32.mrf.mxu0
      %856 = vmatprep.mubr.f32.mxu0 0.0
      %857 = vmatmul.mubr.f32.gmra.mxu0 %v739
      %v858 = vpop.f32.mrf.mxu0
      %v859 = vadd.f32 %v726, %v858
      %v860 = vpop.f32.mrf.mxu0
      %861 = vmatprep.mubr.f32.mxu0 0.0
      %862 = vmatmul.mubr.f32.gmra.mxu0 %v742
      %v863 = vpop.f32.mrf.mxu0
      %v864 = vadd.f32 %v726, %v863
      %v865 = vpop.f32.mrf.mxu0
      %866 = vmatprep.mubr.f32.mxu0 0.0
      %867 = vmatmul.mubr.f32.gmra.mxu0 %v745
      %v868 = vpop.f32.mrf.mxu0
      %v869 = vadd.f32 %v726, %v868
      %v870 = vpop.f32.mrf.mxu0
      %871 = vmatprep.mubr.f32.mxu0 0.0
      %872 = vmatmul.mubr.f32.gmra.mxu0 %v748
      %v873 = vpop.f32.mrf.mxu0
      %v874 = vadd.f32 %v726, %v873
      %v875 = vpop.f32.mrf.mxu0
      %876 = vmatprep.mubr.f32.mxu0 0.0
      %877 = vmatmul.mubr.f32.gmra.mxu0 %v751
      %v878 = vpop.f32.mrf.mxu0
      %v879 = vadd.f32 %v726, %v878
      %v880 = vpop.f32.mrf.mxu0
      %881 = vmatprep.mubr.f32.mxu0 0.0
      %882 = vmatmul.mubr.f32.gmra.mxu0 %v754
      %v883 = vpop.f32.mrf.mxu0
      %v884 = vadd.f32 %v726, %v883
      %v885 = vpop.f32.mrf.mxu0
      %886 = vmatprep.mubr.f32.mxu0 0.0
      %887 = vmatmul.mubr.f32.gmra.mxu0 %v757
      %v888 = vpop.f32.mrf.mxu0
      %v889 = vadd.f32 %v726, %v888
      %v890 = vpop.f32.mrf.mxu0
      %891 = vmatprep.mubr.f32.mxu0 0.0
      %892 = vmatmul.mubr.f32.gmra.mxu0 %v760
      %v893 = vpop.f32.mrf.mxu0
      %v894 = vadd.f32 %v726, %v893
      %v895 = vpop.f32.mrf.mxu0
      %896 = vmatprep.mubr.f32.mxu0 0.0
      %897 = vmatmul.mubr.f32.gmra.mxu0 %v763
      %v898 = vpop.f32.mrf.mxu0
      %v899 = vadd.f32 %v726, %v898
      %v900 = vpop.f32.mrf.mxu0
      %901 = vmatprep.mubr.f32.mxu0 0.0
      %902 = vmatmul.mubr.f32.gmra.mxu0 %v766
      %v903 = vpop.f32.mrf.mxu0
      %v904 = vadd.f32 %v726, %v903
      %v905 = vpop.f32.mrf.mxu0
      %906 = vmatprep.mubr.f32.mxu0 0.0
      %907 = vmatmul.mubr.f32.gmra.mxu0 %v769
      %v908 = vpop.f32.mrf.mxu0
      %v909 = vadd.f32 %v726, %v908
      %v910 = vpop.f32.mrf.mxu0
      %911 = vmatprep.mubr.f32.mxu0 0.0
      %912 = vmatmul.mubr.f32.gmra.mxu0 %v772
      %v913 = vpop.f32.mrf.mxu0
      %v914 = vadd.f32 %v726, %v913
      %v915 = vpop.f32.mrf.mxu0
      %916 = vmatprep.mubr.f32.mxu0 0.0
      %917 = vmatmul.mubr.f32.gmra.mxu0 %v775
      %v918 = vpop.f32.mrf.mxu0
      %v919 = vadd.f32 %v726, %v918
      %v920 = vpop.f32.mrf.mxu0
      %921 = vdwg.mxu0
      %v922 = vmul.f32 %v844, %v844
      %v923 = vmul.f32 %v849, %v849
      %v924 = vmul.f32 %v854, %v854
      %v925 = vmul.f32 %v859, %v859
      %v926 = vmul.f32 %v864, %v864
      %v927 = vmul.f32 %v869, %v869
      %v928 = vmul.f32 %v874, %v874
      %v929 = vmul.f32 %v879, %v879
      %v930 = vmul.f32 %v884, %v884
      %v931 = vmul.f32 %v889, %v889
      %v932 = vmul.f32 %v894, %v894
      %v933 = vmul.f32 %v899, %v899
      %v934 = vmul.f32 %v904, %v904
      %v935 = vmul.f32 %v909, %v909
      %v936 = vmul.f32 %v914, %v914
      %v937 = vmul.f32 %v919, %v919
      %v938 = vmul.f32 %v844, %v922
      %v939 = vmul.f32 %v849, %v923
      %v940 = vmul.f32 %v854, %v924
      %v941 = vmul.f32 %v859, %v925
      %v942 = vmul.f32 %v864, %v926
      %v943 = vmul.f32 %v869, %v927
      %v944 = vmul.f32 %v874, %v928
      %v945 = vmul.f32 %v879, %v929
      %v946 = vmul.f32 %v884, %v930
      %v947 = vmul.f32 %v889, %v931
      %v948 = vmul.f32 %v894, %v932
      %v949 = vmul.f32 %v899, %v933
      %v950 = vmul.f32 %v904, %v934
      %v951 = vmul.f32 %v909, %v935
      %v952 = vmul.f32 %v914, %v936
      %v953 = vmul.f32 %v919, %v937
      %v954 = vmul.f32 %v938, 0.044715
      %v955 = vmul.f32 %v939, 0.044715
      %v956 = vmul.f32 %v940, 0.044715
      %v957 = vmul.f32 %v941, 0.044715
      %v958 = vmul.f32 %v942, 0.044715
      %v959 = vmul.f32 %v943, 0.044715
      %v960 = vmul.f32 %v944, 0.044715
      %v961 = vmul.f32 %v945, 0.044715
      %v962 = vmul.f32 %v946, 0.044715
      %v963 = vmul.f32 %v947, 0.044715
      %v964 = vmul.f32 %v948, 0.044715
      %v965 = vmul.f32 %v949, 0.044715
      %v966 = vmul.f32 %v950, 0.044715
      %v967 = vmul.f32 %v951, 0.044715
      %v968 = vmul.f32 %v952, 0.044715
      %v969 = vmul.f32 %v953, 0.044715
      %v970 = vadd.f32 %v844, %v954
      %v971 = vadd.f32 %v849, %v955
      %v972 = vadd.f32 %v854, %v956
      %v973 = vadd.f32 %v859, %v957
      %v974 = vadd.f32 %v864, %v958
      %v975 = vadd.f32 %v869, %v959
      %v976 = vadd.f32 %v874, %v960
      %v977 = vadd.f32 %v879, %v961
      %v978 = vadd.f32 %v884, %v962
      %v979 = vadd.f32 %v889, %v963
      %v980 = vadd.f32 %v894, %v964
      %v981 = vadd.f32 %v899, %v965
      %v982 = vadd.f32 %v904, %v966
      %v983 = vadd.f32 %v909, %v967
      %v984 = vadd.f32 %v914, %v968
      %v985 = vadd.f32 %v919, %v969
      %v986 = vmul.f32 %v970, 0.7978846
      %v987 = vmul.f32 %v971, 0.7978846
      %v988 = vmul.f32 %v972, 0.7978846
      %v989 = vmul.f32 %v973, 0.7978846
      %v990 = vmul.f32 %v974, 0.7978846
      %v991 = vmul.f32 %v975, 0.7978846
      %v992 = vmul.f32 %v976, 0.7978846
      %v993 = vmul.f32 %v977, 0.7978846
      %v994 = vmul.f32 %v978, 0.7978846
      %v995 = vmul.f32 %v979, 0.7978846
      %v996 = vmul.f32 %v980, 0.7978846
      %v997 = vmul.f32 %v981, 0.7978846
      %v998 = vmul.f32 %v982, 0.7978846
      %v999 = vmul.f32 %v983, 0.7978846
      %v1000 = vmul.f32 %v984, 0.7978846
      %v1001 = vmul.f32 %v985, 0.7978846
      %v1002 = vtanh.pop %v986
      %v1003 = vtanh.pop %v987
      %v1004 = vtanh.pop %v988
      %v1005 = vtanh.pop %v989
      %v1006 = vtanh.pop %v990
      %v1007 = vtanh.pop %v991
      %v1008 = vtanh.pop %v992
      %v1009 = vtanh.pop %v993
      %v1010 = vtanh.pop %v994
      %v1011 = vtanh.pop %v995
      %v1012 = vtanh.pop %v996
      %v1013 = vtanh.pop %v997
      %v1014 = vtanh.pop %v998
      %v1015 = vtanh.pop %v999
      %v1016 = vtanh.pop %v1000
      %v1017 = vtanh.pop %v1001
      %v1018 = vadd.f32 %v1002, 1.0
      %v1019 = vadd.f32 %v1003, 1.0
      %v1020 = vadd.f32 %v1004, 1.0
      %v1021 = vadd.f32 %v1005, 1.0
      %v1022 = vadd.f32 %v1006, 1.0
      %v1023 = vadd.f32 %v1007, 1.0
      %v1024 = vadd.f32 %v1008, 1.0
      %v1025 = vadd.f32 %v1009, 1.0
      %v1026 = vadd.f32 %v1010, 1.0
      %v1027 = vadd.f32 %v1011, 1.0
      %v1028 = vadd.f32 %v1012, 1.0
      %v1029 = vadd.f32 %v1013, 1.0
      %v1030 = vadd.f32 %v1014, 1.0
      %v1031 = vadd.f32 %v1015, 1.0
      %v1032 = vadd.f32 %v1016, 1.0
      %v1033 = vadd.f32 %v1017, 1.0
      %v1034 = vmul.f32 %v1018, 0.5
      %v1035 = vmul.f32 %v1019, 0.5
      %v1036 = vmul.f32 %v1020, 0.5
      %v1037 = vmul.f32 %v1021, 0.5
      %v1038 = vmul.f32 %v1022, 0.5
      %v1039 = vmul.f32 %v1023, 0.5
      %v1040 = vmul.f32 %v1024, 0.5
      %v1041 = vmul.f32 %v1025, 0.5
      %v1042 = vmul.f32 %v1026, 0.5
      %v1043 = vmul.f32 %v1027, 0.5
      %v1044 = vmul.f32 %v1028, 0.5
      %v1045 = vmul.f32 %v1029, 0.5
      %v1046 = vmul.f32 %v1030, 0.5
      %v1047 = vmul.f32 %v1031, 0.5
      %v1048 = vmul.f32 %v1032, 0.5
      %v1049 = vmul.f32 %v1033, 0.5
      %v1050 = vmul.f32 %v844, %v1034
      %v1051 = vmul.f32 %v849, %v1035
      %v1052 = vmul.f32 %v854, %v1036
      %v1053 = vmul.f32 %v859, %v1037
      %v1054 = vmul.f32 %v864, %v1038
      %v1055 = vmul.f32 %v869, %v1039
      %v1056 = vmul.f32 %v874, %v1040
      %v1057 = vmul.f32 %v879, %v1041
      %v1058 = vmul.f32 %v884, %v1042
      %v1059 = vmul.f32 %v889, %v1043
      %v1060 = vmul.f32 %v894, %v1044
      %v1061 = vmul.f32 %v899, %v1045
      %v1062 = vmul.f32 %v904, %v1046
      %v1063 = vmul.f32 %v909, %v1047
      %v1064 = vmul.f32 %v914, %v1048
      %v1065 = vmul.f32 %v919, %v1049
      %v1066 = vld [vmem:[%s345] sm:$0xff]
      %v1067 = vld [vmem:[%s345 + $0x8] sm:$0xff]
      %v1068 = vld [vmem:[%s345 + $0x10] sm:$0xff]
      %v1069 = vld [vmem:[%s345 + $0x18] sm:$0xff]
      %v1070 = vld [vmem:[%s345 + $0x20] sm:$0xff]
      %v1071 = vld [vmem:[%s345 + $0x28] sm:$0xff]
      %v1072 = vld [vmem:[%s345 + $0x30] sm:$0xff]
      %v1073 = vld [vmem:[%s345 + $0x38] sm:$0xff]
      %v1074 = vld [vmem:[%s345 + $0x40] sm:$0xff]
      %v1075 = vld [vmem:[%s345 + $0x48] sm:$0xff]
      %v1076 = vld [vmem:[%s345 + $0x50] sm:$0xff]
      %v1077 = vld [vmem:[%s345 + $0x58] sm:$0xff]
      %v1078 = vld [vmem:[%s345 + $0x60] sm:$0xff]
      %v1079 = vld [vmem:[%s345 + $0x68] sm:$0xff]
      %v1080 = vld [vmem:[%s345 + $0x70] sm:$0xff]
      %v1081 = vld [vmem:[%s345 + $0x78] sm:$0xff]
      %1083 = vset.pattern.permute.xlu0 0
      %1084 = vperm.xlu0 %1083, %v1066
      %v1085 = vpop.permute.xlu0 %1084
      %1088 = vset.pattern.permute.xlu0 0
      %1089 = vperm.xlu0 %1088, %v1067
      %v1090 = vpop.permute.xlu0 %1089
      %1093 = vset.pattern.permute.xlu0 0
      %1094 = vperm.xlu0 %1093, %v1068
      %v1095 = vpop.permute.xlu0 %1094
      %1098 = vset.pattern.permute.xlu0 0
      %1099 = vperm.xlu0 %1098, %v1069
      %v1100 = vpop.permute.xlu0 %1099
      %1103 = vset.pattern.permute.xlu0 0
      %1104 = vperm.xlu0 %1103, %v1070
      %v1105 = vpop.permute.xlu0 %1104
      %1108 = vset.pattern.permute.xlu0 0
      %1109 = vperm.xlu0 %1108, %v1071
      %v1110 = vpop.permute.xlu0 %1109
      %1113 = vset.pattern.permute.xlu0 0
      %1114 = vperm.xlu0 %1113, %v1072
      %v1115 = vpop.permute.xlu0 %1114
      %1118 = vset.pattern.permute.xlu0 0
      %1119 = vperm.xlu0 %1118, %v1073
      %v1120 = vpop.permute.xlu0 %1119
      %1123 = vset.pattern.permute.xlu0 0
      %1124 = vperm.xlu0 %1123, %v1074
      %v1125 = vpop.permute.xlu0 %1124
      %1128 = vset.pattern.permute.xlu0 0
      %1129 = vperm.xlu0 %1128, %v1075
      %v1130 = vpop.permute.xlu0 %1129
      %1133 = vset.pattern.permute.xlu0 0
      %1134 = vperm.xlu0 %1133, %v1076
      %v1135 = vpop.permute.xlu0 %1134
      %1138 = vset.pattern.permute.xlu0 0
      %1139 = vperm.xlu0 %1138, %v1077
      %v1140 = vpop.permute.xlu0 %1139
      %1143 = vset.pattern.permute.xlu0 0
      %1144 = vperm.xlu0 %1143, %v1078
      %v1145 = vpop.permute.xlu0 %1144
      %1148 = vset.pattern.permute.xlu0 0
      %1149 = vperm.xlu0 %1148, %v1079
      %v1150 = vpop.permute.xlu0 %1149
      %1153 = vset.pattern.permute.xlu0 0
      %1154 = vperm.xlu0 %1153, %v1080
      %v1155 = vpop.permute.xlu0 %1154
      %1158 = vset.pattern.permute.xlu0 0
      %1159 = vperm.xlu0 %1158, %v1081
      %v1160 = vpop.permute.xlu0 %1159
      %v1162 = vmul.f32 %v1050, %v1085
      %v1163 = vmul.f32 %v1051, %v1090
      %v1164 = vmul.f32 %v1052, %v1095
      %v1165 = vmul.f32 %v1053, %v1100
      %v1166 = vmul.f32 %v1054, %v1105
      %v1167 = vmul.f32 %v1055, %v1110
      %v1168 = vmul.f32 %v1056, %v1115
      %v1169 = vmul.f32 %v1057, %v1120
      %v1170 = vmul.f32 %v1058, %v1125
      %v1171 = vmul.f32 %v1059, %v1130
      %v1172 = vmul.f32 %v1060, %v1135
      %v1173 = vmul.f32 %v1061, %v1140
      %v1174 = vmul.f32 %v1062, %v1145
      %v1175 = vmul.f32 %v1063, %v1150
      %v1176 = vmul.f32 %v1064, %v1155
      %v1177 = vmul.f32 %v1065, %v1160
      %1178 = vst.msk [vmem:[%s351] sm:$0xff] %vm728, %v1162
      %1179 = vst.msk [vmem:[%s351 + $0x8] sm:$0xff] %vm728, %v1163
      %1180 = vst.msk [vmem:[%s351 + $0x10] sm:$0xff] %vm728, %v1164
      %1181 = vst.msk [vmem:[%s351 + $0x18] sm:$0xff] %vm728, %v1165
      %1182 = vst.msk [vmem:[%s351 + $0x20] sm:$0xff] %vm728, %v1166
      %1183 = vst.msk [vmem:[%s351 + $0x28] sm:$0xff] %vm728, %v1167
      %1184 = vst.msk [vmem:[%s351 + $0x30] sm:$0xff] %vm728, %v1168
      %1185 = vst.msk [vmem:[%s351 + $0x38] sm:$0xff] %vm728, %v1169
      %1186 = vst.msk [vmem:[%s351 + $0x40] sm:$0xff] %vm728, %v1170
      %1187 = vst.msk [vmem:[%s351 + $0x48] sm:$0xff] %vm728, %v1171
      %1188 = vst.msk [vmem:[%s351 + $0x50] sm:$0xff] %vm728, %v1172
      %1189 = vst.msk [vmem:[%s351 + $0x58] sm:$0xff] %vm728, %v1173
      %1190 = vst.msk [vmem:[%s351 + $0x60] sm:$0xff] %vm728, %v1174
      %1191 = vst.msk [vmem:[%s351 + $0x68] sm:$0xff] %vm728, %v1175
      %1192 = vst.msk [vmem:[%s351 + $0x70] sm:$0xff] %vm728, %v1176
      %1193 = vst.msk [vmem:[%s351 + $0x78] sm:$0xff] %vm728, %v1177
      %s1194 = smul.u32 16, %s24
      %p1195 = scmp.lt.s32.totalorder %s1194, 31
      %s1196 = scalar_select %p1195, %s1194, 31
      %s1197 = smul.addr %s1196, 8
      %s1198 = scalar_lea.vmem %s7, %s1197
      // Predicated region
      $region45: #{multi_input_vector_embedding.1} parent=43 // pred_check
        %p1199 = pneg %p199
      $region46: #{multi_input_vector_embedding.1} parent=43 // pred_check_branch
        %1201 = sbr.rel (%p1199) target = $region48
      $region47: #{multi_input_vector_embedding.1} parent=43 // pred_region
        %s1202 = smul.u32 16, %s24
      $region48: #{multi_input_vector_embedding.1} parent=43 // pred_fallthru
        _
    $region44: #{multi_input_vector_embedding.1} parent=5 // pred_fallthru
      _
    %p1203 = scmp.le.s32.totalorder 2, %s19
    // Predicated region
    $region49: #{multi_input_vector_embedding.1} parent=5 // pred_check
      %p1204 = pneg %p1203
    $region50: #{multi_input_vector_embedding.1} parent=5 // pred_check_branch
      %1206 = sbr.rel (%p1204) target = $region52
    $region51: #{multi_input_vector_embedding.1} parent=5 // pred_region
      %s1207 = ssub.s32 %s19, 2
      // Predicated region
      $region53: #{multi_input_vector_embedding.1} parent=51 // pred_check
        %p1208 = pneg %p205
      $region54: #{multi_input_vector_embedding.1} parent=51 // pred_check_branch
        %1210 = sbr.rel (%p1208) target = $region56
      $region55: #{multi_input_vector_embedding.1} parent=51 // pred_region
        %s1211 = smul.u32 16, %s25
        %p1212 = scmp.lt.s32.totalorder %s1211, 31
        %s1213 = scalar_select %p1212, %s1211, 31
        %s1214 = smul.addr %s1213, 8
        %s1215 = scalar_lea.vmem %s7, %s1214
      $region56: #{multi_input_vector_embedding.1} parent=51 // pred_fallthru
        _
    $region52: #{multi_input_vector_embedding.1} parent=5 // pred_fallthru
      _
  $region6: #{multi_input_vector_embedding.1} parent=0 // loop_footer
    %s23 = sadd.s32 1, %s19
  $region7: #{multi_input_vector_embedding.1} parent=0 // loop_footer_branch
    %18 = sbr.rel target = $region3
  $region8: #{multi_input_vector_embedding.1} parent=0 // loop_exit
    _

</llo_original>
